<compile_context>
chip_gen: v6e
topology: v6e:2x2x1
jax: 0.10.0
libtpu: 0.0.40
codegen_flags: <defaults>
</compile_context>

<pallas_src>
import functools

import jax
import jax.numpy as jnp
from jax.experimental import pallas as pl
from jax.experimental.pallas import tpu as pltpu


def _round_up(a, b):
    return (a + b - 1) // b * b


def _gem_kernel(x_ref, o_ref, *, p, eps, hw):
    # x_ref: (tile_r, hw) tile in VMEM; o_ref: (tile_r, 1)
    x = x_ref[...]
    x = jnp.maximum(x, jnp.asarray(eps, dtype=x.dtype))  # clamp(min=eps), native dtype

    # f32 accumulation for the lane reduction (XLU), then mean over full (H, W).
    s = jnp.sum(x, axis=-1, keepdims=True, dtype=jnp.float32)
    mean = s * jnp.float32(1.0 / hw)

    # .pow(1/p); mean >= eps > 0 so log is well defined. exp/log run on the EUP.
    out = jnp.exp(jnp.log(mean) * jnp.float32(1.0 / p))
    o_ref[...] = out.astype(o_ref.dtype)


def gem_pallas(x, p=3, eps=1e-6, *, tile_rows=None):
    """x: (N, C, H, W) -> (N, C, 1, 1), matching GeM.forward."""
    N, C, H, W = x.shape
    rows = N * C
    hw = H * W

    x2 = x.reshape(rows, hw)  # contiguous reshape: no data movement

    # Row tile sized from the *physical* VMEM footprint: lanes pad to 128 for
    # both the (tile_r, hw) input tile and the (tile_r, 1) output tile, and
    # each is double-buffered by the Pallas pipeline. Keep the total ~8 MiB.
    itemsize = jnp.dtype(x2.dtype).itemsize
    in_row_bytes = _round_up(hw, 128) * itemsize
    out_row_bytes = 128 * itemsize
    budget_bytes = 8 * 1024 * 1024
    tile_r = budget_bytes // (2 * (in_row_bytes + out_row_bytes))
    tile_r = max(8, (tile_r // 8) * 8)
    if tile_rows is not None:
        tile_r = tile_rows
    if tile_r >= rows:
        tile_r = rows  # full extent (also covers rows < 8)

    grid = (pl.cdiv(rows, tile_r),)

    out = pl.pallas_call(
        functools.partial(_gem_kernel, p=float(p), eps=float(eps), hw=hw),
        out_shape=jax.ShapeDtypeStruct((rows, 1), x.dtype),
        grid=grid,
        in_specs=[pl.BlockSpec((tile_r, hw), lambda i: (i, 0))],
        out_specs=pl.BlockSpec((tile_r, 1), lambda i: (i, 0)),
        compiler_params=pltpu.CompilerParams(
            dimension_semantics=("parallel",)  # rows are independent
        ),
    )(x2)

    return out.reshape(N, C, 1, 1)


class GeM:
    """Parity with the PyTorch module (p_trainable=False -> p is a plain scalar)."""

    def __init__(self, p=3, eps=1e-6, p_trainable=False):
        # TODO(synk): p is baked in as a static scalar; a truly trainable p
        # would be passed to the kernel as an SMEM scalar input instead.
        self.p = jnp.ones((1,), jnp.float32) * p if p_trainable else p
        self.eps = eps

    def __call__(self, x):
        p_val = float(self.p[0]) if isinstance(self.p, jnp.ndarray) else float(self.p)
        return gem_pallas(x, p=p_val, eps=self.eps)


def _gem_ref(x, p=3, eps=1e-6):
    # Pure-JAX reference with the same semantics as the PyTorch code.
    xf = x.astype(jnp.float32)
    m = jnp.mean(jnp.maximum(xf, eps), axis=(-2, -1), keepdims=True)
    return (m ** (1.0 / p)).astype(x.dtype)


if __name__ == "__main__":
    key = jax.random.PRNGKey(0)
    mod = GeM(p=3, eps=1e-6)

    # Primary example (lane-dense H*W = 256).
    N, C, H, W = 2, 4, 16, 16
    x = jax.random.normal(key, (N, C, H, W), dtype=jnp.float32)
    y = jax.block_until_ready(mod(x))
    ref = _gem_ref(x, p=3, eps=1e-6)
    assert y.shape == (N, C, 1, 1)
    assert jnp.allclose(y, ref, atol=1e-5, rtol=1e-5)

    # Non-lane-aligned spatial extent (typical GeM 7x7 input, no padding path).
    x7 = jax.random.normal(jax.random.PRNGKey(1), (2, 4, 7, 7), dtype=jnp.float32)
    y7 = jax.block_until_ready(mod(x7))
    assert jnp.allclose(y7, _gem_ref(x7, p=3, eps=1e-6), atol=1e-5, rtol=1e-5)

    # Grid with a partial last row-block (rows=12, tile_rows=8) to exercise
    # the masked-store boundary path.
    xg = jax.random.normal(jax.random.PRNGKey(2), (3, 4, 7, 7), dtype=jnp.float32)
    yg = jax.block_until_ready(gem_pallas(xg, p=3, eps=1e-6, tile_rows=8))
    assert jnp.allclose(yg, _gem_ref(xg, p=3, eps=1e-6), atol=1e-5, rtol=1e-5)

    # bf16 input: clamp in bf16, accumulate in f32, cast back (looser tolerance).
    xb = jax.random.normal(jax.random.PRNGKey(3), (2, 4, 16, 16), dtype=jnp.bfloat16)
    yb = jax.block_until_ready(mod(xb))
    refb = _gem_ref(xb, p=3, eps=1e-6)
    assert jnp.allclose(
        yb.astype(jnp.float32), refb.astype(jnp.float32), atol=2e-2, rtol=2e-2
    )

    print("KERNEL_OK")
</pallas_src>

<mosaic_0001>
module attributes {stable_mosaic.version = 11 : i64} {
  func.func @_gem_kernel(%arg0: i32, %arg1: memref<8x256xf32, #tpu.memory_space<vmem>>, %arg2: memref<8x1xf32, #tpu.memory_space<vmem>>) attributes {dimension_semantics = [#tpu.dimension_semantics<parallel>], iteration_bounds = array<i64: 1>, scalar_prefetch = 0 : i64, scratch_operands = 0 : i64, tpu.core_type = #tpu.core_type<tc>, window_params = [{transform_indices = @transform_0, window_bounds = array<i64: 8, 256>}, {transform_indices = @transform_1, window_bounds = array<i64: 8, 1>}]} {
    %c0 = arith.constant 0 : index
    %c0_0 = arith.constant 0 : index
    %0 = vector.load %arg1[%c0, %c0_0] : memref<8x256xf32, #tpu.memory_space<vmem>>, vector<8x256xf32>
    %cst = arith.constant 9.99999997E-7 : f32
    %1 = vector.broadcast %cst : f32 to vector<8x256xf32>
    %2 = arith.maximumf %0, %1 : vector<8x256xf32>
    %cst_1 = arith.constant dense<0.000000e+00> : vector<8xf32>
    %3 = vector.multi_reduction <add>, %2, %cst_1 [1] : vector<8x256xf32> to vector<8xf32>
    %4 = vector.shape_cast %3 : vector<8xf32> to vector<8x1xf32>
    %cst_2 = arith.constant 3.906250e-03 : f32
    %5 = vector.broadcast %cst_2 : f32 to vector<8x1xf32>
    %6 = arith.mulf %4, %5 : vector<8x1xf32>
    %7 = math.log %6 : vector<8x1xf32>
    %cst_3 = arith.constant 0.333333343 : f32
    %8 = vector.broadcast %cst_3 : f32 to vector<8x1xf32>
    %9 = arith.mulf %7, %8 : vector<8x1xf32>
    %10 = math.exp %9 : vector<8x1xf32>
    %c0_4 = arith.constant 0 : index
    %c0_5 = arith.constant 0 : index
    %11 = vector.load %arg2[%c0_4, %c0_5] : memref<8x1xf32, #tpu.memory_space<vmem>>, vector<8x1xf32>
    tpu.vector_store %arg2[%c0_4, %c0_5], %10 {strides = array<i32>} : memref<8x1xf32, #tpu.memory_space<vmem>>, vector<8x1xf32>,
    return
  }
  func.func @transform_0(%arg0: i32) -> (i32, i32) {
    %c0_i32 = arith.constant 0 : i32
    %c0_i32_0 = arith.constant 0 : i32
    return %arg0, %c0_i32 : i32, i32
  }
  func.func @transform_1(%arg0: i32) -> (i32, i32) {
    %c0_i32 = arith.constant 0 : i32
    %c0_i32_0 = arith.constant 0 : i32
    return %arg0, %c0_i32 : i32, i32
  }
}

</mosaic_0001>

<llo_original>
// kernel: tpu_custom_call.1
$region0: #{tpu_custom_call.1}
  #allocation0 [shape = 'u32[]', space=smem, size = 0x4, offset = 0x4, fixed_abs, tag = 'smem constant byte address 0x4 - core index']
  #allocation1 [shape = 'u32[144,128]{1,0:T(1,128)}', space=vmem, size = 0x12000, scoped, tag = 'internal scratch']
  %s0 = inlined_call_operand.hbm [shape: f32[8,256], index: 0, kind: input, shape index: {}]
  %s1 = inlined_call_operand.vmem [shape: f32[8,1], index: 1, kind: output, shape index: {}]
  %s2 = sld [smem:[#allocation0]]
  $region18: #{tpu_custom_call.1} parent=0
    _
  %s4 = ssub.s32 1, %s2
  %s5 = scalar_select 0, %s4, %s2
  $region1: #{tpu_custom_call.1} parent=0
    #allocation2 [shape = 'u8[8192]{0}', space=vmem, size = 0x2000, scoped, tag = 'input window, operand 0, single buffered']
    #allocation3 [shape = 's32[1]{0}', space=sflag, size = 0x4, scoped, tag = 'scoped memory for tpu_custom_call.1']
    %6 = vsyncpa [#allocation3], 0
    // Predicated region
    $region2: #{tpu_custom_call.1} parent=1 // pred_check
      _
    $region3: #{tpu_custom_call.1} parent=1 // pred_check_branch
      %8 = sbr.rel (0) target = $region5
    $region4: #{tpu_custom_call.1} parent=1 // pred_region
      %s10 = ssub.s32 256, 256
      %11 = vsyncadd [#allocation3], %s10
      %s13 = sshll.u32 [#allocation2], 4
      %s14 = int_to_ptr.vmem [resolvable:$true] %s13
      %16 = dma.hbm_to_vmem [thread:$0]  %s0, 256, %s14, [#allocation3]
    $region5: #{tpu_custom_call.1} parent=1 // pred_fallthru
      _
    // Predicated region
    $region6: #{tpu_custom_call.1} parent=1 // pred_check
      _
    $region7: #{tpu_custom_call.1} parent=1 // pred_check_branch
      %18 = sbr.rel (0) target = $region9
    $region8: #{tpu_custom_call.1} parent=1 // pred_region
      %19 = dma.done [#allocation3], 256
    $region9: #{tpu_custom_call.1} parent=1 // pred_fallthru
      _
    %v20 = vld [vmem:[#allocation2] sm:$0xff]
    %v21 = vld [vmem:[#allocation2 + $0x8] sm:$0xff]
    %v22 = vmax.f32 %v20, 1e-06
    %v23 = vmax.f32 %v21, 1e-06
    %v24 = vadd.f32 %v22, %v23
    %25 = vadd.xlane.f32.xlu0 %v24
    %v26 = vpop.xlane.xlu0 %25
    %v27 = vmul.f32 %v26, 0.00390625
    %v28 = vlog2.pop %v27
    %v29 = vmul.f32 %v28, 0.6931472
    %v30 = vmul.f32 %v29, 0.33333334
    %v31 = vmul.f32 %v30, 1.442695
    %v32 = vpow.pop %v31
    %vm33 = vcmask 7168
    %34 = vst.msk [vmem:[%s1] sm:$0xff] %vm33, %v32
    // Predicated region
    $region10: #{tpu_custom_call.1} parent=1 // pred_check
      _
    $region11: #{tpu_custom_call.1} parent=1 // pred_check_branch
      %36 = sbr.rel (0) target = $region13
    $region12: #{tpu_custom_call.1} parent=1 // pred_region
      _
    $region13: #{tpu_custom_call.1} parent=1 // pred_fallthru
      _
    // Predicated region
    $region14: #{tpu_custom_call.1} parent=1 // pred_check
      _
    $region15: #{tpu_custom_call.1} parent=1 // pred_check_branch
      %38 = sbr.rel (0) target = $region17
    $region16: #{tpu_custom_call.1} parent=1 // pred_region
      _
    $region17: #{tpu_custom_call.1} parent=1 // pred_fallthru
      _
    %39 = vsyncpa [#allocation3], 1

</llo_original>
